<compile_context>
chip_gen: v6e
topology: v6e:2x2x1
jax: 0.10.0
libtpu: 0.0.40
codegen_flags: <defaults>
</compile_context>

<pallas_src>
import functools

import jax
import jax.numpy as jnp
from jax.experimental import pallas as pl
from jax.experimental.pallas import tpu as pltpu


def _qos_mlp_kernel(x_ref, w1_ref, b1_ref, w2_ref, b2_ref, w3_ref, b3_ref,
                    o_ref, *, packed_out):
    # Fused hot path: three matmuls + ReLU + softmax, all in VMEM.
    x = x_ref[...]                     # (block_b, D), f32 or bf16

    # Matmuls run in x.dtype operands (bf16 path uses the MXU natively),
    # accumulate in f32; bias add / ReLU / softmax stay in f32.
    h1 = jnp.dot(x, w1_ref[...], preferred_element_type=jnp.float32) + b1_ref[...]
    h1 = jnp.maximum(h1, 0.0).astype(x.dtype)

    h2 = jnp.dot(h1, w2_ref[...], preferred_element_type=jnp.float32) + b2_ref[...]
    h2 = jnp.maximum(h2, 0.0).astype(x.dtype)

    logits = jnp.dot(h2, w3_ref[...], preferred_element_type=jnp.float32) + b3_ref[...]

    # Numerically stable softmax over the class axis (dim=1). Exact division is
    # kept (pl.reciprocal(approx=True) would break the 1e-5 tolerance).
    m = jnp.max(logits, axis=1, keepdims=True)
    e = jnp.exp(logits - m)
    probs = e / jnp.sum(e, axis=1, keepdims=True)          # (block_b, n_out) f32

    if packed_out:
        # Repack to a lane-dense (block_b*n_out/128, 128) slab. Row-major bytes
        # are identical to (block_b, n_out), so the wrapper reshape is free.
        o_ref[...] = probs.reshape(o_ref.shape)
    else:
        o_ref[...] = probs


def qos_classifier_forward(x, params, *, block_b=None):
    """x: (B, input_dim) f32 or bf16. params: pre-transposed weights/biases.

    Returns softmax probabilities of shape (B, 2) in float32.
    """
    B, D = x.shape
    w1, b1 = params["w1"], params["b1"]   # (D, 64), (1, 64)
    w2, b2 = params["w2"], params["b2"]   # (64, 32), (1, 32)
    w3, b3 = params["w3"], params["b3"]   # (32, 2),  (1, 2)
    n_out = w3.shape[1]

    # Matmul operands follow x's dtype (bf16 x -> bf16 weights on the MXU);
    # biases stay f32 since they're added to the f32 accumulator.
    compute_dtype = x.dtype
    w1 = w1.astype(compute_dtype)
    w2 = w2.astype(compute_dtype)
    w3 = w3.astype(compute_dtype)
    b1 = b1.astype(jnp.float32)
    b2 = b2.astype(jnp.float32)
    b3 = b3.astype(jnp.float32)

    # ---- batch tiling -------------------------------------------------------
    # 2048-row tiles: big enough to amortize the ~0.35us/step grid overhead and
    # hit the HBM roofline, small enough (~few MiB double-buffered) for v7x's
    # 64 MiB VMEM; multiple of 512 so the packed output block satisfies (8,128).
    if block_b is None:
        block_b = B if B <= 2048 else 2048
    block_b = min(block_b, B)
    if block_b != B:
        block_b = max(8, (block_b // 8) * 8)   # (8,128) sublane rule

    num_tiles = pl.cdiv(B, block_b)
    grid = (num_tiles,)

    # ---- output layout ------------------------------------------------------
    # Lane-dense packed output when shapes allow it:
    #   full out array (B*n_out/128, 128); per-tile block (block_b*n_out/128, 128).
    lanes = 128
    packed = (
        (lanes % n_out == 0)
        and (B * n_out) % lanes == 0
        and (block_b == B or (block_b * n_out) % (8 * lanes) == 0)
    )

    if packed:
        out_rows = (B * n_out) // lanes
        blk_rows = (block_b * n_out) // lanes
        out_shape = jax.ShapeDtypeStruct((out_rows, lanes), jnp.float32)
        out_spec = pl.BlockSpec((blk_rows, lanes), lambda i: (i, 0))
    else:
        out_shape = jax.ShapeDtypeStruct((B, n_out), jnp.float32)
        out_spec = pl.BlockSpec((block_b, n_out), lambda i: (i, 0))

    kernel = functools.partial(_qos_mlp_kernel, packed_out=packed)

    # Weights/biases: grid-invariant full blocks (loaded once, not re-DMA'd).
    full = lambda a: pl.BlockSpec(a.shape, lambda i: (0, 0))

    out = pl.pallas_call(
        kernel,
        out_shape=out_shape,
        grid_spec=pltpu.PrefetchScalarGridSpec(
            num_scalar_prefetch=0,
            grid=grid,
            in_specs=[
                pl.BlockSpec((block_b, D), lambda i: (i, 0)),   # x tile
                full(w1), full(b1),
                full(w2), full(b2),
                full(w3), full(b3),
            ],
            out_specs=out_spec,
        ),
        compiler_params=pltpu.CompilerParams(
            dimension_semantics=("parallel",),      # batch tiles shard across TCs
            vmem_limit_bytes=32 * 1024 * 1024,      # safe on v5e/v6e/v7x
        ),
    )(x, w1, b1, w2, b2, w3, b3)

    if packed:
        out = out.reshape(B, n_out)   # metadata-only reshape (same bytes)
    return out


def init_params(key, input_dim):
    """Deterministic init mimicking nn.Linear shapes (weights stored transposed)."""
    ks = jax.random.split(key, 6)

    def linear(kw, kb, fan_in, fan_out):
        bound = 1.0 / jnp.sqrt(fan_in)
        # PyTorch stores (out, in); we store transposed (in, out) for x @ W.
        w = jax.random.uniform(kw, (fan_in, fan_out), jnp.float32, -bound, bound)
        b = jax.random.uniform(kb, (1, fan_out), jnp.float32, -bound, bound)
        return w, b

    w1, b1 = linear(ks[0], ks[1], input_dim, 64)
    w2, b2 = linear(ks[2], ks[3], 64, 32)
    w3, b3 = linear(ks[4], ks[5], 32, 2)
    return {"w1": w1, "b1": b1, "w2": w2, "b2": b2, "w3": w3, "b3": b3}


def reference_forward(x, p):
    h1 = jnp.maximum(x @ p["w1"] + p["b1"], 0.0)
    h2 = jnp.maximum(h1 @ p["w2"] + p["b2"], 0.0)
    logits = h2 @ p["w3"] + p["b3"]
    return jax.nn.softmax(logits, axis=1)


if __name__ == "__main__":
    key = jax.random.PRNGKey(0)
    k_x, k_p, k_x2 = jax.random.split(key, 3)

    input_dim = 32
    params = init_params(k_p, input_dim)

    # --- small batch: single tile, plain (B, 2) output layout ----------------
    x_small = jax.random.normal(k_x, (8, input_dim), jnp.float32)
    out_small = jax.block_until_ready(qos_classifier_forward(x_small, params))
    ref_small = reference_forward(x_small, params)
    assert out_small.shape == (8, 2)
    assert jnp.allclose(out_small, ref_small, atol=1e-5, rtol=1e-5)
    assert jnp.allclose(jnp.sum(out_small, axis=1), 1.0, atol=1e-5)

    # --- larger batch: multi-step grid + lane-dense packed output (ragged last
    #     tile: 1280 rows / 512-row tiles) -------------------------------------
    B = 1280
    x_big = jax.random.normal(k_x2, (B, input_dim), jnp.float32)
    out_big = jax.block_until_ready(
        qos_classifier_forward(x_big, params, block_b=512))
    ref_big = reference_forward(x_big, params)
    assert out_big.shape == (B, 2)
    assert jnp.allclose(out_big, ref_big, atol=1e-5, rtol=1e-5)
    assert jnp.allclose(jnp.sum(out_big, axis=1), 1.0, atol=1e-5)

    # --- bf16 matmul operands (f32 epilogue), loosened tolerance -------------
    x_bf16 = x_big.astype(jnp.bfloat16)
    out_bf16 = jax.block_until_ready(
        qos_classifier_forward(x_bf16, params, block_b=512))
    ref_bf16 = reference_forward(x_bf16.astype(jnp.float32), params)
    assert out_bf16.shape == (B, 2)
    assert jnp.allclose(out_bf16, ref_bf16, atol=2e-2)
    assert jnp.allclose(jnp.sum(out_bf16, axis=1), 1.0, atol=1e-2)

    print("KERNEL_OK")
</pallas_src>

<mosaic_0001>
module attributes {stable_mosaic.version = 11 : i64} {
  func.func @_qos_mlp_kernel(%arg0: i32, %arg1: memref<8x32xf32, #tpu.memory_space<vmem>>, %arg2: memref<32x64xf32, #tpu.memory_space<vmem>>, %arg3: memref<1x64xf32, #tpu.memory_space<vmem>>, %arg4: memref<64x32xf32, #tpu.memory_space<vmem>>, %arg5: memref<1x32xf32, #tpu.memory_space<vmem>>, %arg6: memref<32x2xf32, #tpu.memory_space<vmem>>, %arg7: memref<1x2xf32, #tpu.memory_space<vmem>>, %arg8: memref<8x2xf32, #tpu.memory_space<vmem>>) attributes {dimension_semantics = [#tpu.dimension_semantics<parallel>], iteration_bounds = array<i64: 1>, scalar_prefetch = 0 : i64, scratch_operands = 0 : i64, tpu.core_type = #tpu.core_type<tc>, window_params = [{transform_indices = @transform_0, window_bounds = array<i64: 8, 32>}, {pipeline_mode = #tpu.pipeline_mode<synchronous>, transform_indices = @transform_1, window_bounds = array<i64: 32, 64>}, {pipeline_mode = #tpu.pipeline_mode<synchronous>, transform_indices = @transform_2, window_bounds = array<i64: 1, 64>}, {pipeline_mode = #tpu.pipeline_mode<synchronous>, transform_indices = @transform_3, window_bounds = array<i64: 64, 32>}, {pipeline_mode = #tpu.pipeline_mode<synchronous>, transform_indices = @transform_4, window_bounds = array<i64: 1, 32>}, {pipeline_mode = #tpu.pipeline_mode<synchronous>, transform_indices = @transform_5, window_bounds = array<i64: 32, 2>}, {pipeline_mode = #tpu.pipeline_mode<synchronous>, transform_indices = @transform_6, window_bounds = array<i64: 1, 2>}, {transform_indices = @transform_7, window_bounds = array<i64: 8, 2>}]} {
    %c0 = arith.constant 0 : index
    %c0_0 = arith.constant 0 : index
    %0 = vector.load %arg1[%c0, %c0_0] : memref<8x32xf32, #tpu.memory_space<vmem>>, vector<8x32xf32>
    %c0_1 = arith.constant 0 : index
    %c0_2 = arith.constant 0 : index
    %1 = vector.load %arg2[%c0_1, %c0_2] : memref<32x64xf32, #tpu.memory_space<vmem>>, vector<32x64xf32>
    %cst = arith.constant dense<0.000000e+00> : vector<8x64xf32>
    %2 = tpu.matmul %0, %1, %cst {dimension_numbers = #tpu.dot_dimension_numbers<[1], [0], [0], [1], [0, 0, 1, 1], [], []>} : vector<8x32xf32>, vector<32x64xf32>, vector<8x64xf32> -> vector<8x64xf32>
    %c0_3 = arith.constant 0 : index
    %c0_4 = arith.constant 0 : index
    %3 = vector.load %arg3[%c0_3, %c0_4] : memref<1x64xf32, #tpu.memory_space<vmem>>, vector<1x64xf32>
    %4 = vector.broadcast %3 : vector<1x64xf32> to vector<8x64xf32>
    %5 = arith.addf %2, %4 : vector<8x64xf32>
    %cst_5 = arith.constant 0.000000e+00 : f32
    %6 = vector.broadcast %cst_5 : f32 to vector<8x64xf32>
    %7 = arith.maximumf %5, %6 : vector<8x64xf32>
    %c0_6 = arith.constant 0 : index
    %c0_7 = arith.constant 0 : index
    %8 = vector.load %arg4[%c0_6, %c0_7] : memref<64x32xf32, #tpu.memory_space<vmem>>, vector<64x32xf32>
    %cst_8 = arith.constant dense<0.000000e+00> : vector<8x32xf32>
    %9 = tpu.matmul %7, %8, %cst_8 {dimension_numbers = #tpu.dot_dimension_numbers<[1], [0], [0], [1], [0, 0, 1, 1], [], []>} : vector<8x64xf32>, vector<64x32xf32>, vector<8x32xf32> -> vector<8x32xf32>
    %c0_9 = arith.constant 0 : index
    %c0_10 = arith.constant 0 : index
    %10 = vector.load %arg5[%c0_9, %c0_10] : memref<1x32xf32, #tpu.memory_space<vmem>>, vector<1x32xf32>
    %11 = vector.broadcast %10 : vector<1x32xf32> to vector<8x32xf32>
    %12 = arith.addf %9, %11 : vector<8x32xf32>
    %cst_11 = arith.constant 0.000000e+00 : f32
    %13 = vector.broadcast %cst_11 : f32 to vector<8x32xf32>
    %14 = arith.maximumf %12, %13 : vector<8x32xf32>
    %c0_12 = arith.constant 0 : index
    %c0_13 = arith.constant 0 : index
    %15 = vector.load %arg6[%c0_12, %c0_13] : memref<32x2xf32, #tpu.memory_space<vmem>>, vector<32x2xf32>
    %cst_14 = arith.constant dense<0.000000e+00> : vector<8x2xf32>
    %16 = tpu.matmul %14, %15, %cst_14 {dimension_numbers = #tpu.dot_dimension_numbers<[1], [0], [0], [1], [0, 0, 1, 1], [], []>} : vector<8x32xf32>, vector<32x2xf32>, vector<8x2xf32> -> vector<8x2xf32>
    %c0_15 = arith.constant 0 : index
    %c0_16 = arith.constant 0 : index
    %17 = vector.load %arg7[%c0_15, %c0_16] : memref<1x2xf32, #tpu.memory_space<vmem>>, vector<1x2xf32>
    %18 = vector.broadcast %17 : vector<1x2xf32> to vector<8x2xf32>
    %19 = arith.addf %16, %18 : vector<8x2xf32>
    %cst_17 = arith.constant dense<0xFF800000> : vector<8xf32>
    %20 = vector.multi_reduction <maximumf>, %19, %cst_17 [1] : vector<8x2xf32> to vector<8xf32>
    %21 = vector.shape_cast %20 : vector<8xf32> to vector<8x1xf32>
    %22 = vector.broadcast %21 : vector<8x1xf32> to vector<8x2xf32>
    %23 = arith.subf %19, %22 : vector<8x2xf32>
    %24 = math.exp %23 : vector<8x2xf32>
    %cst_18 = arith.constant dense<0.000000e+00> : vector<8xf32>
    %25 = vector.multi_reduction <add>, %24, %cst_18 [1] : vector<8x2xf32> to vector<8xf32>
    %26 = vector.shape_cast %25 : vector<8xf32> to vector<8x1xf32>
    %27 = vector.broadcast %26 : vector<8x1xf32> to vector<8x2xf32>
    %28 = arith.divf %24, %27 : vector<8x2xf32>
    %c0_19 = arith.constant 0 : index
    %c0_20 = arith.constant 0 : index
    %29 = vector.load %arg8[%c0_19, %c0_20] : memref<8x2xf32, #tpu.memory_space<vmem>>, vector<8x2xf32>
    tpu.vector_store %arg8[%c0_19, %c0_20], %28 {strides = array<i32>} : memref<8x2xf32, #tpu.memory_space<vmem>>, vector<8x2xf32>,
    return
  }
  func.func @transform_0(%arg0: i32) -> (i32, i32) {
    %c0_i32 = arith.constant 0 : i32
    %c0_i32_0 = arith.constant 0 : i32
    return %arg0, %c0_i32 : i32, i32
  }
  func.func @transform_1(%arg0: i32) -> (i32, i32) {
    %c0_i32 = arith.constant 0 : i32
    %c0_i32_0 = arith.constant 0 : i32
    %c0_i32_1 = arith.constant 0 : i32
    return %c0_i32, %c0_i32_0 : i32, i32
  }
  func.func @transform_2(%arg0: i32) -> (i32, i32) {
    %c0_i32 = arith.constant 0 : i32
    %c0_i32_0 = arith.constant 0 : i32
    %c0_i32_1 = arith.constant 0 : i32
    return %c0_i32, %c0_i32_0 : i32, i32
  }
  func.func @transform_3(%arg0: i32) -> (i32, i32) {
    %c0_i32 = arith.constant 0 : i32
    %c0_i32_0 = arith.constant 0 : i32
    %c0_i32_1 = arith.constant 0 : i32
    return %c0_i32, %c0_i32_0 : i32, i32
  }
  func.func @transform_4(%arg0: i32) -> (i32, i32) {
    %c0_i32 = arith.constant 0 : i32
    %c0_i32_0 = arith.constant 0 : i32
    %c0_i32_1 = arith.constant 0 : i32
    return %c0_i32, %c0_i32_0 : i32, i32
  }
  func.func @transform_5(%arg0: i32) -> (i32, i32) {
    %c0_i32 = arith.constant 0 : i32
    %c0_i32_0 = arith.constant 0 : i32
    %c0_i32_1 = arith.constant 0 : i32
    return %c0_i32, %c0_i32_0 : i32, i32
  }
  func.func @transform_6(%arg0: i32) -> (i32, i32) {
    %c0_i32 = arith.constant 0 : i32
    %c0_i32_0 = arith.constant 0 : i32
    %c0_i32_1 = arith.constant 0 : i32
    return %c0_i32, %c0_i32_0 : i32, i32
  }
  func.func @transform_7(%arg0: i32) -> (i32, i32) {
    %c0_i32 = arith.constant 0 : i32
    %c0_i32_0 = arith.constant 0 : i32
    return %arg0, %c0_i32 : i32, i32
  }
}

</mosaic_0001>

<llo_original>
// kernel: tpu_custom_call.1
$region0: #{tpu_custom_call.1}
  #allocation0 [shape = 'u32[]', space=smem, size = 0x4, offset = 0x4, fixed_abs, tag = 'smem constant byte address 0x4 - core index']
  #allocation1 [shape = 'u32[144,128]{1,0:T(1,128)}', space=vmem, size = 0x12000, scoped, tag = 'internal scratch']
  %s0 = inlined_call_operand.vmem [shape: f32[8,32], index: 0, kind: input, shape index: {}]
  %s1 = inlined_call_operand.vmem [shape: f32[32,64], index: 1, kind: input, shape index: {}]
  %s2 = inlined_call_operand.vmem [shape: f32[1,64], index: 2, kind: input, shape index: {}]
  %s3 = inlined_call_operand.vmem [shape: f32[64,32], index: 3, kind: input, shape index: {}]
  %s4 = inlined_call_operand.vmem [shape: f32[1,32], index: 4, kind: input, shape index: {}]
  %s5 = inlined_call_operand.vmem [shape: f32[32,2], index: 5, kind: input, shape index: {}]
  %s6 = inlined_call_operand.vmem [shape: f32[1,2], index: 6, kind: input, shape index: {}]
  %s7 = inlined_call_operand.vmem [shape: f32[8,2], index: 7, kind: output, shape index: {}]
  %s8 = sld [smem:[#allocation0]]
  $region38: #{tpu_custom_call.1} parent=0
    _
  %s10 = ssub.s32 1, %s8
  %s11 = scalar_select 0, %s10, %s8
  // Predicated region
  $region2: #{tpu_custom_call.1} parent=0 // pred_check
    _
  $region3: #{tpu_custom_call.1} parent=0 // pred_check_branch
    %13 = sbr.rel (0) target = $region5
  $region4: #{tpu_custom_call.1} parent=0 // pred_region
    _
  $region5: #{tpu_custom_call.1} parent=0 // pred_fallthru
    _
  // Predicated region
  $region6: #{tpu_custom_call.1} parent=0 // pred_check
    _
  $region7: #{tpu_custom_call.1} parent=0 // pred_check_branch
    %15 = sbr.rel (0) target = $region9
  $region8: #{tpu_custom_call.1} parent=0 // pred_region
    _
  $region9: #{tpu_custom_call.1} parent=0 // pred_fallthru
    _
  // Predicated region
  $region10: #{tpu_custom_call.1} parent=0 // pred_check
    _
  $region11: #{tpu_custom_call.1} parent=0 // pred_check_branch
    %17 = sbr.rel (0) target = $region13
  $region12: #{tpu_custom_call.1} parent=0 // pred_region
    _
  $region13: #{tpu_custom_call.1} parent=0 // pred_fallthru
    _
  // Predicated region
  $region14: #{tpu_custom_call.1} parent=0 // pred_check
    _
  $region15: #{tpu_custom_call.1} parent=0 // pred_check_branch
    %19 = sbr.rel (0) target = $region17
  $region16: #{tpu_custom_call.1} parent=0 // pred_region
    _
  $region17: #{tpu_custom_call.1} parent=0 // pred_fallthru
    _
  // Predicated region
  $region18: #{tpu_custom_call.1} parent=0 // pred_check
    _
  $region19: #{tpu_custom_call.1} parent=0 // pred_check_branch
    %21 = sbr.rel (0) target = $region21
  $region20: #{tpu_custom_call.1} parent=0 // pred_region
    _
  $region21: #{tpu_custom_call.1} parent=0 // pred_fallthru
    _
  // Predicated region
  $region22: #{tpu_custom_call.1} parent=0 // pred_check
    _
  $region23: #{tpu_custom_call.1} parent=0 // pred_check_branch
    %23 = sbr.rel (0) target = $region25
  $region24: #{tpu_custom_call.1} parent=0 // pred_region
    _
  $region25: #{tpu_custom_call.1} parent=0 // pred_fallthru
    _
  // Predicated region
  $region26: #{tpu_custom_call.1} parent=0 // pred_check
    _
  $region27: #{tpu_custom_call.1} parent=0 // pred_check_branch
    %25 = sbr.rel (0) target = $region29
  $region28: #{tpu_custom_call.1} parent=0 // pred_region
    _
  $region29: #{tpu_custom_call.1} parent=0 // pred_fallthru
    _
  %v26 = vld [vmem:[%s0] sm:$0xff]
  %v27 = vld [vmem:[%s1] sm:$0xff]
  %v28 = vld [vmem:[%s1 + $0x8] sm:$0xff]
  %v29 = vld [vmem:[%s1 + $0x10] sm:$0xff]
  %v30 = vld [vmem:[%s1 + $0x18] sm:$0xff]
  %v31 = vld [vmem:[%s2] sm:$0x1]
  %v33 = vlaneseq
  %v34 = vshrl.u32 %v33, 7
  %v35 = vsub.s32 0, %v34
  %v36 = vrot.slane %v31, %v35
  %vm38 = vcmask 261120
  %v40 = vsel %vm38, %v26, 0
  %42 = vmatprep.subr.mxu0 0.0
  %43 = vmatpush1.msra.mxu0 0.0
  %44 = vmatprep.subr.mxu0 0.0
  %45 = vmatpush1.msra.mxu0 0.0
  %46 = vmatprep.subr.mxu0 0.0
  %47 = vmatpush1.msra.mxu0 0.0
  %48 = vmatprep.subr.mxu0 0.0
  %49 = vmatpush1.msra.mxu0 0.0
  %50 = vmatprep.subr.mxu0 0.0
  %51 = vmatpush1.msra.mxu0 0.0
  %52 = vmatprep.subr.mxu0 0.0
  %53 = vmatpush1.msra.mxu0 0.0
  %54 = vmatprep.subr.mxu0 0.0
  %55 = vmatpush1.msra.mxu0 0.0
  %56 = vmatprep.subr.mxu0 0.0
  %57 = vmatpush1.msra.mxu0 0.0
  %58 = vmatprep.subr.mxu0 0.0
  %59 = vmatpush1.msra.mxu0 0.0
  %60 = vmatprep.subr.mxu0 0.0
  %61 = vmatpush1.msra.mxu0 0.0
  %62 = vmatprep.subr.mxu0 0.0
  %63 = vmatpush1.msra.mxu0 0.0
  %64 = vmatprep.subr.mxu0 0.0
  %65 = vmatpush1.msra.mxu0 0.0
  %66 = vmatprep.subr.mxu0 0.0
  %67 = vmatpush1.msra.mxu0 %v30
  %68 = vmatprep.subr.mxu0 0.0
  %69 = vmatpush1.msra.mxu0 %v29
  %70 = vmatprep.subr.mxu0 0.0
  %71 = vmatpush1.msra.mxu0 %v28
  %72 = vmatprep.subr.mxu0 0.0
  %73 = vmatpush1.msra.mxu0 %v27
  %74 = vmatprep.subr.mxu0 0.0
  %75 = vmatpush2.msra.mxu0 0.0
  %76 = vmatprep.subr.mxu0 0.0
  %77 = vmatpush2.msra.mxu0 0.0
  %78 = vmatprep.subr.mxu0 0.0
  %79 = vmatpush2.msra.mxu0 0.0
  %80 = vmatprep.subr.mxu0 0.0
  %81 = vmatpush2.msra.mxu0 0.0
  %82 = vmatprep.subr.mxu0 0.0
  %83 = vmatpush2.msra.mxu0 0.0
  %84 = vmatprep.subr.mxu0 0.0
  %85 = vmatpush2.msra.mxu0 0.0
  %86 = vmatprep.subr.mxu0 0.0
  %87 = vmatpush2.msra.mxu0 0.0
  %88 = vmatprep.subr.mxu0 0.0
  %89 = vmatpush2.msra.mxu0 0.0
  %90 = vmatprep.subr.mxu0 0.0
  %91 = vmatpush2.msra.mxu0 0.0
  %92 = vmatprep.subr.mxu0 0.0
  %93 = vmatpush2.msra.mxu0 0.0
  %94 = vmatprep.subr.mxu0 0.0
  %95 = vmatpush2.msra.mxu0 0.0
  %96 = vmatprep.subr.mxu0 0.0
  %97 = vmatpush2.msra.mxu0 0.0
  %98 = vmatprep.subr.mxu0 0.0
  %99 = vmatpush2.msra.mxu0 0.0
  %100 = vmatprep.subr.mxu0 0.0
  %101 = vmatpush2.msra.mxu0 0.0
  %102 = vmatprep.subr.mxu0 0.0
  %103 = vmatpush2.msra.mxu0 0.0
  %104 = vmatprep.subr.mxu0 0.0
  %105 = vmatpush2.msra.mxu0 0.0
  %106 = vmatprep.mubr.f32.mxu0 0.0
  %107 = vmatmul.mubr.f32.gmra.mxu0 %v40
  %v108 = vpop.f32.mrf.mxu0
  %v109 = vadd.f32 %v36, %v108
  %v110 = vpop.f32.mrf.mxu0
  %111 = vdwg.mxu0
  %v112 = vmax.f32 %v109, 0.0
  %v113 = vld [vmem:[%s3] sm:$0xff]
  %v114 = vld [vmem:[%s3 + $0x8] sm:$0xff]
  %v115 = vld [vmem:[%s3 + $0x10] sm:$0xff]
  %v116 = vld [vmem:[%s3 + $0x18] sm:$0xff]
  %v117 = vld [vmem:[%s3 + $0x20] sm:$0xff]
  %v118 = vld [vmem:[%s3 + $0x28] sm:$0xff]
  %v119 = vld [vmem:[%s3 + $0x30] sm:$0xff]
  %v120 = vld [vmem:[%s3 + $0x38] sm:$0xff]
  %v121 = vld [vmem:[%s4] sm:$0x1]
  %v123 = vlaneseq
  %v124 = vshrl.u32 %v123, 7
  %v125 = vsub.s32 0, %v124
  %v126 = vrot.slane %v121, %v125
  %vm128 = vcmask 523264
  %v130 = vsel %vm128, %v112, 0
  %132 = vmatprep.subr.mxu0 0.0
  %133 = vmatpush1.msra.mxu0 0.0
  %134 = vmatprep.subr.mxu0 0.0
  %135 = vmatpush1.msra.mxu0 0.0
  %136 = vmatprep.subr.mxu0 0.0
  %137 = vmatpush1.msra.mxu0 0.0
  %138 = vmatprep.subr.mxu0 0.0
  %139 = vmatpush1.msra.mxu0 0.0
  %140 = vmatprep.subr.mxu0 0.0
  %141 = vmatpush1.msra.mxu0 0.0
  %142 = vmatprep.subr.mxu0 0.0
  %143 = vmatpush1.msra.mxu0 0.0
  %144 = vmatprep.subr.mxu0 0.0
  %145 = vmatpush1.msra.mxu0 0.0
  %146 = vmatprep.subr.mxu0 0.0
  %147 = vmatpush1.msra.mxu0 0.0
  %148 = vmatprep.subr.mxu0 0.0
  %149 = vmatpush1.msra.mxu0 %v120
  %150 = vmatprep.subr.mxu0 0.0
  %151 = vmatpush1.msra.mxu0 %v119
  %152 = vmatprep.subr.mxu0 0.0
  %153 = vmatpush1.msra.mxu0 %v118
  %154 = vmatprep.subr.mxu0 0.0
  %155 = vmatpush1.msra.mxu0 %v117
  %156 = vmatprep.subr.mxu0 0.0
  %157 = vmatpush1.msra.mxu0 %v116
  %158 = vmatprep.subr.mxu0 0.0
  %159 = vmatpush1.msra.mxu0 %v115
  %160 = vmatprep.subr.mxu0 0.0
  %161 = vmatpush1.msra.mxu0 %v114
  %162 = vmatprep.subr.mxu0 0.0
  %163 = vmatpush1.msra.mxu0 %v113
  %164 = vmatprep.subr.mxu0 0.0
  %165 = vmatpush2.msra.mxu0 0.0
  %166 = vmatprep.subr.mxu0 0.0
  %167 = vmatpush2.msra.mxu0 0.0
  %168 = vmatprep.subr.mxu0 0.0
  %169 = vmatpush2.msra.mxu0 0.0
  %170 = vmatprep.subr.mxu0 0.0
  %171 = vmatpush2.msra.mxu0 0.0
  %172 = vmatprep.subr.mxu0 0.0
  %173 = vmatpush2.msra.mxu0 0.0
  %174 = vmatprep.subr.mxu0 0.0
  %175 = vmatpush2.msra.mxu0 0.0
  %176 = vmatprep.subr.mxu0 0.0
  %177 = vmatpush2.msra.mxu0 0.0
  %178 = vmatprep.subr.mxu0 0.0
  %179 = vmatpush2.msra.mxu0 0.0
  %180 = vmatprep.subr.mxu0 0.0
  %181 = vmatpush2.msra.mxu0 0.0
  %182 = vmatprep.subr.mxu0 0.0
  %183 = vmatpush2.msra.mxu0 0.0
  %184 = vmatprep.subr.mxu0 0.0
  %185 = vmatpush2.msra.mxu0 0.0
  %186 = vmatprep.subr.mxu0 0.0
  %187 = vmatpush2.msra.mxu0 0.0
  %188 = vmatprep.subr.mxu0 0.0
  %189 = vmatpush2.msra.mxu0 0.0
  %190 = vmatprep.subr.mxu0 0.0
  %191 = vmatpush2.msra.mxu0 0.0
  %192 = vmatprep.subr.mxu0 0.0
  %193 = vmatpush2.msra.mxu0 0.0
  %194 = vmatprep.subr.mxu0 0.0
  %195 = vmatpush2.msra.mxu0 0.0
  %196 = vmatprep.mubr.f32.mxu0 0.0
  %197 = vmatmul.mubr.f32.gmra.mxu0 %v130
  %v198 = vpop.f32.mrf.mxu0
  %v199 = vadd.f32 %v126, %v198
  %v200 = vpop.f32.mrf.mxu0
  %201 = vdwg.mxu0
  %v202 = vmax.f32 %v199, 0.0
  %v203 = vld [vmem:[%s5] sm:$0xff]
  %v204 = vld [vmem:[%s5 + $0x8] sm:$0xff]
  %v205 = vld [vmem:[%s5 + $0x10] sm:$0xff]
  %v206 = vld [vmem:[%s5 + $0x18] sm:$0xff]
  %v207 = vld [vmem:[%s6] sm:$0x1]
  %v209 = vlaneseq
  %v210 = vshrl.u32 %v209, 7
  %v211 = vsub.s32 0, %v210
  %v212 = vrot.slane %v207, %v211
  %v215 = vsel %vm38, %v202, 0
  %217 = vmatprep.subr.mxu0 0.0
  %218 = vmatpush1.msra.mxu0 0.0
  %219 = vmatprep.subr.mxu0 0.0
  %220 = vmatpush1.msra.mxu0 0.0
  %221 = vmatprep.subr.mxu0 0.0
  %222 = vmatpush1.msra.mxu0 0.0
  %223 = vmatprep.subr.mxu0 0.0
  %224 = vmatpush1.msra.mxu0 0.0
  %225 = vmatprep.subr.mxu0 0.0
  %226 = vmatpush1.msra.mxu0 0.0
  %227 = vmatprep.subr.mxu0 0.0
  %228 = vmatpush1.msra.mxu0 0.0
  %229 = vmatprep.subr.mxu0 0.0
  %230 = vmatpush1.msra.mxu0 0.0
  %231 = vmatprep.subr.mxu0 0.0
  %232 = vmatpush1.msra.mxu0 0.0
  %233 = vmatprep.subr.mxu0 0.0
  %234 = vmatpush1.msra.mxu0 0.0
  %235 = vmatprep.subr.mxu0 0.0
  %236 = vmatpush1.msra.mxu0 0.0
  %237 = vmatprep.subr.mxu0 0.0
  %238 = vmatpush1.msra.mxu0 0.0
  %239 = vmatprep.subr.mxu0 0.0
  %240 = vmatpush1.msra.mxu0 0.0
  %241 = vmatprep.subr.mxu0 0.0
  %242 = vmatpush1.msra.mxu0 %v206
  %243 = vmatprep.subr.mxu0 0.0
  %244 = vmatpush1.msra.mxu0 %v205
  %245 = vmatprep.subr.mxu0 0.0
  %246 = vmatpush1.msra.mxu0 %v204
  %247 = vmatprep.subr.mxu0 0.0
  %248 = vmatpush1.msra.mxu0 %v203
  %249 = vmatprep.subr.mxu0 0.0
  %250 = vmatpush2.msra.mxu0 0.0
  %251 = vmatprep.subr.mxu0 0.0
  %252 = vmatpush2.msra.mxu0 0.0
  %253 = vmatprep.subr.mxu0 0.0
  %254 = vmatpush2.msra.mxu0 0.0
  %255 = vmatprep.subr.mxu0 0.0
  %256 = vmatpush2.msra.mxu0 0.0
  %257 = vmatprep.subr.mxu0 0.0
  %258 = vmatpush2.msra.mxu0 0.0
  %259 = vmatprep.subr.mxu0 0.0
  %260 = vmatpush2.msra.mxu0 0.0
  %261 = vmatprep.subr.mxu0 0.0
  %262 = vmatpush2.msra.mxu0 0.0
  %263 = vmatprep.subr.mxu0 0.0
  %264 = vmatpush2.msra.mxu0 0.0
  %265 = vmatprep.subr.mxu0 0.0
  %266 = vmatpush2.msra.mxu0 0.0
  %267 = vmatprep.subr.mxu0 0.0
  %268 = vmatpush2.msra.mxu0 0.0
  %269 = vmatprep.subr.mxu0 0.0
  %270 = vmatpush2.msra.mxu0 0.0
  %271 = vmatprep.subr.mxu0 0.0
  %272 = vmatpush2.msra.mxu0 0.0
  %273 = vmatprep.subr.mxu0 0.0
  %274 = vmatpush2.msra.mxu0 0.0
  %275 = vmatprep.subr.mxu0 0.0
  %276 = vmatpush2.msra.mxu0 0.0
  %277 = vmatprep.subr.mxu0 0.0
  %278 = vmatpush2.msra.mxu0 0.0
  %279 = vmatprep.subr.mxu0 0.0
  %280 = vmatpush2.msra.mxu0 0.0
  %281 = vmatprep.mubr.f32.mxu0 0.0
  %282 = vmatmul.mubr.f32.gmra.mxu0 %v215
  %v283 = vpop.f32.mrf.mxu0
  %v284 = vadd.f32 %v212, %v283
  %v285 = vpop.f32.mrf.mxu0
  %286 = vdwg.mxu0
  %vm287 = vcmask 15360
  %v288 = vsel %vm287, %v284, -inf
  %289 = vmax.xlane.f32.xlu0 %v288
  %v290 = vpop.xlane.xlu0 %289
  %v291 = vsub.f32 %v284, %v290
  %v292 = vmul.f32 %v291, 1.442695
  %v293 = vpow.pop %v292
  %v294 = vsel %vm287, %v293, 0.0
  %295 = vadd.xlane.f32.xlu0 %v294
  %v296 = vpop.xlane.xlu0 %295
  %v297 = vrcp.pop %v296
  %v298 = vmul.f32 %v293, %v297
  %299 = vst.msk [vmem:[%s7] sm:$0xff] %vm287, %v298
  // Predicated region
  $region30: #{tpu_custom_call.1} parent=0 // pred_check
    _
  $region31: #{tpu_custom_call.1} parent=0 // pred_check_branch
    %301 = sbr.rel (0) target = $region33
  $region32: #{tpu_custom_call.1} parent=0 // pred_region
    _
  $region33: #{tpu_custom_call.1} parent=0 // pred_fallthru
    _
  // Predicated region
  $region34: #{tpu_custom_call.1} parent=0 // pred_check
    _
  $region35: #{tpu_custom_call.1} parent=0 // pred_check_branch
    %303 = sbr.rel (0) target = $region37
  $region36: #{tpu_custom_call.1} parent=0 // pred_region
    _
  $region37: #{tpu_custom_call.1} parent=0 // pred_fallthru
    _

</llo_original>
